<compile_context>
chip_gen: v7x
topology: tpu7x:2x2x1
jax: 0.10.0
libtpu: 0.0.40
codegen_flags: <defaults>
</compile_context>

<pallas_src>
import jax
import jax.numpy as jnp
from jax.experimental import pallas as pl
from jax.experimental.pallas import tpu as pltpu


_MAX_WIDTH = 8192            # lane-dense slab width cap (elements)
_MAX_CHUNKS = 8              # number of concurrent HBM->HBM DMAs
_MIN_CHUNK_BYTES = 1 << 20   # don't fragment into DMAs smaller than ~1 MiB


def _lane_dense_2d(n):
    """Factor n (multiple of 128) into (R, C) with C a wide multiple of 128."""
    groups = n // 128
    max_f = min(groups, _MAX_WIDTH // 128)
    f = 1
    for cand in range(max_f, 0, -1):      # <= 64 candidates, static Python
        if groups % cand == 0:
            f = cand
            break
    c = 128 * f
    r = groups // f
    return r, c


def _chunk_rows(r, row_bytes):
    """Split R rows into <= _MAX_CHUNKS contiguous (start, size) chunks."""
    min_rows = max(1, -(-_MIN_CHUNK_BYTES // row_bytes))   # ceil div
    n_chunks = max(1, min(_MAX_CHUNKS, r // min_rows, r))
    base, rem = divmod(r, n_chunks)
    chunks, start = [], 0
    for k in range(n_chunks):
        size = base + (1 if k < rem else 0)
        chunks.append((start, size))
        start += size
    return chunks


def _make_chunked_hbm_copy_kernel(chunks):
    """Kernel: issue one HBM->HBM DMA per chunk (along axis 0), then wait."""
    def kernel(x_hbm, o_hbm, sems):
        copies = []
        for k, (start, size) in enumerate(chunks):
            cp = pltpu.make_async_copy(
                x_hbm.at[pl.ds(start, size)],
                o_hbm.at[pl.ds(start, size)],
                sems.at[k],
            )
            cp.start()
            copies.append(cp)
        for cp in copies:
            cp.wait()
    return kernel


def _whole_hbm_copy_kernel(x_hbm, o_hbm, sem):
    """Kernel: single whole-array HBM->HBM DMA (arbitrary shape / dtype)."""
    cp = pltpu.make_async_copy(x_hbm, o_hbm, sem)
    cp.start()
    cp.wait()


def identity_copy_pallas(x, *, donate=False):
    """Materialized identity copy of `x` via chunked HBM->HBM DMAs."""
    n = x.size
    if n == 0:
        # Nothing to copy; empty output is indistinguishable from x.
        return x
    if donate:
        # An aliased in-place copy of identical bytes is pure wasted HBM
        # bandwidth; returning x is strictly faster and value-identical.
        # TODO(synk): if callers require a *distinct donated buffer*, drop this
        # short-circuit and use input_output_aliases={0: 0} instead.
        return x

    itemsize = jnp.dtype(x.dtype).itemsize
    nbytes = n * itemsize
    cost = pl.CostEstimate(flops=0, transcendentals=0, bytes_accessed=2 * nbytes)
    hbm_spec = pl.BlockSpec(memory_space=pl.ANY)

    if n % 128 == 0:
        # Lane-dense 2D slab (metadata-only reshape), chunked along rows so
        # several large DMAs are in flight concurrently.
        r, c = _lane_dense_2d(n)
        x_view = x.reshape(r, c)
        chunks = _chunk_rows(r, c * itemsize)
        out = pl.pallas_call(
            _make_chunked_hbm_copy_kernel(chunks),
            out_shape=jax.ShapeDtypeStruct((r, c), x.dtype),
            in_specs=[hbm_spec],
            out_specs=hbm_spec,
            scratch_shapes=[pltpu.SemaphoreType.DMA((len(chunks),))],
            cost_estimate=cost,
        )(x_view)
        return out.reshape(x.shape)

    # Fallback for shapes not divisible by 128: one whole-array DMA in the
    # original shape (no padding, no VMEM staging).
    x_view = x.reshape(1, 1) if x.ndim == 0 else x
    out = pl.pallas_call(
        _whole_hbm_copy_kernel,
        out_shape=jax.ShapeDtypeStruct(x_view.shape, x.dtype),
        in_specs=[hbm_spec],
        out_specs=hbm_spec,
        scratch_shapes=[pltpu.SemaphoreType.DMA(())],
        cost_estimate=cost,
    )(x_view)
    return out.reshape(x.shape)


def identity_quan_forward(x, bits=None, is_activation=False,
                          floor_tensor=False, *, force_kernel=False):
    """JAX equivalent of IdentityQuan.forward: returns x unchanged.

    Default path short-circuits (zero cost — no kernel launch, no HBM
    read/write).  Set force_kernel=True to route through the Pallas HBM->HBM
    copy kernel when a materialized copy is required.  `bits`,
    `is_activation`, `floor_tensor` are accepted for API parity and ignored,
    exactly as in the PyTorch module.
    """
    if force_kernel:
        return identity_copy_pallas(x)
    return x


class IdentityQuan:
    """Minimal JAX port of the PyTorch IdentityQuan module."""

    def __init__(self, bit=None, *args, **kwargs):
        self.x_min_fp32 = None
        self.x_max_fp32 = None

    def init_from(self, x, bit_list, *args, **kwargs):
        return

    def set_quant_range(self, x_min, x_max):
        pass

    def __call__(self, x, bits=None, is_activation=False, floor_tensor=False):
        # True identity: return the input array directly (zero HBM traffic).
        return identity_quan_forward(x, bits, is_activation, floor_tensor)


if __name__ == "__main__":
    key = jax.random.PRNGKey(0)
    k0, k1 = jax.random.split(key)

    # NCHW activation-like input, small shape.
    x = jax.random.normal(k0, (2, 4, 16, 16), dtype=jnp.float32)

    quan = IdentityQuan(bit=8)

    # Default (recommended) path: zero-cost identity.
    y_fast = quan(x, bits=8, is_activation=True)

    # Forced-kernel path: chunked HBM->HBM DMA copy.
    y_kernel = identity_quan_forward(x, bits=8, is_activation=True,
                                     force_kernel=True)
    y_kernel = jax.block_until_ready(y_kernel)

    # Second dtype through the same DMA copy path (bf16, lane-divisible).
    xb = jax.random.normal(k1, (2, 8, 32), dtype=jnp.bfloat16)
    yb = jax.block_until_ready(identity_copy_pallas(xb))

    assert y_fast.shape == x.shape and y_fast.dtype == x.dtype
    assert y_kernel.shape == x.shape and y_kernel.dtype == x.dtype
    assert yb.shape == xb.shape and yb.dtype == xb.dtype
    assert bool(jnp.all(y_fast == x))
    assert bool(jnp.all(y_kernel == x))
    assert bool(jnp.all(yb == xb))
    print("KERNEL_OK")
</pallas_src>

<mosaic_0001>
module attributes {stable_mosaic.version = 11 : i64} {
  func.func @kernel(%arg0: memref<1x2048xf32, #tpu.memory_space<any>>, %arg1: memref<1x2048xf32, #tpu.memory_space<any>>, %arg2: memref<1x!tpu.dma_semaphore, #tpu.memory_space<semaphore_mem>>) attributes {dimension_semantics = [], scalar_prefetch = 0 : i64, scratch_operands = 1 : i64, tpu.core_type = #tpu.core_type<tc>} {
    %c0_i32 = arith.constant 0 : i32
    %c0_i32_0 = arith.constant 0 : i32
    %c0_i32_1 = arith.constant 0 : i32
    %0 = tpu.memref_slice %arg0[%c0_i32_0, %c0_i32_1] : memref<1x2048xf32, #tpu.memory_space<any>> -> memref<1x2048xf32, #tpu.memory_space<any>>
    %c0_i32_2 = arith.constant 0 : i32
    %c0_i32_3 = arith.constant 0 : i32
    %1 = tpu.memref_slice %arg1[%c0_i32_2, %c0_i32_3] : memref<1x2048xf32, #tpu.memory_space<any>> -> memref<1x2048xf32, #tpu.memory_space<any>>
    %2 = tpu.memref_slice %arg2[%c0_i32] : memref<1x!tpu.dma_semaphore, #tpu.memory_space<semaphore_mem>> -> memref<1x!tpu.dma_semaphore, #tpu.memory_space<semaphore_mem>>
    %3 = tpu.memref_squeeze %2 : memref<1x!tpu.dma_semaphore, #tpu.memory_space<semaphore_mem>> -> memref<!tpu.dma_semaphore, #tpu.memory_space<semaphore_mem>>
    tpu.enqueue_dma source(%0 : memref<1x2048xf32, #tpu.memory_space<any>>) target(%1 : memref<1x2048xf32, #tpu.memory_space<any>>) target_semaphore(%3 : memref<!tpu.dma_semaphore, #tpu.memory_space<semaphore_mem>>)
    %c0_i32_4 = arith.constant 0 : i32
    %c0_i32_5 = arith.constant 0 : i32
    %c0_i32_6 = arith.constant 0 : i32
    %4 = tpu.memref_slice %arg0[%c0_i32_5, %c0_i32_6] : memref<1x2048xf32, #tpu.memory_space<any>> -> memref<1x2048xf32, #tpu.memory_space<any>>
    %c0_i32_7 = arith.constant 0 : i32
    %c0_i32_8 = arith.constant 0 : i32
    %5 = tpu.memref_slice %arg1[%c0_i32_7, %c0_i32_8] : memref<1x2048xf32, #tpu.memory_space<any>> -> memref<1x2048xf32, #tpu.memory_space<any>>
    %6 = tpu.memref_slice %arg2[%c0_i32_4] : memref<1x!tpu.dma_semaphore, #tpu.memory_space<semaphore_mem>> -> memref<1x!tpu.dma_semaphore, #tpu.memory_space<semaphore_mem>>
    %7 = tpu.memref_squeeze %6 : memref<1x!tpu.dma_semaphore, #tpu.memory_space<semaphore_mem>> -> memref<!tpu.dma_semaphore, #tpu.memory_space<semaphore_mem>>
    tpu.wait_dma2 semaphore(%7 : memref<!tpu.dma_semaphore, #tpu.memory_space<semaphore_mem>>) src(%4 : memref<1x2048xf32, #tpu.memory_space<any>>) dst(%5 : memref<1x2048xf32, #tpu.memory_space<any>>)
    return
  }
}

</mosaic_0001>

<llo_original>
// kernel: tpu_custom_call.1
$region0: #{tpu_custom_call.1}
  #allocation0 [shape = 'u32[]', space=smem, size = 0x4, offset = 0x4, fixed_abs, tag = 'smem constant byte address 0x4 - core index']
  #allocation1 [shape = 'u32[144,128]{1,0:T(1,128)}', space=vmem, size = 0x12000, scoped, tag = 'internal scratch']
  #allocation2 [shape = 's32[1]{0}', space=sflag, size = 0x4, scoped, tag = 'scratch operand']
  #allocation3 [shape = 's32[]', space=sflag, size = 0x4, offset = 0, fixed_abs, tag = 'sflag constant byte address 0x0 - dummy sync flag']
  #allocation4 [shape = 'u32[0]{0}', space=smem, size = 0, offset = 0, fixed_abs, tag = 'smem constant byte address 0x0 - null']
  %s0 = inlined_call_operand.hbm [shape: f32[1,2048], index: 0, kind: input, shape index: {}]
  %s1 = inlined_call_operand.hbm [shape: f32[1,2048], index: 1, kind: output, shape index: {}]
  %s2 = sld [smem:[#allocation0]]
  $region2: #{tpu_custom_call.1} parent=0
    _
  %s4 = ssub.s32 1, %s2
  %s5 = scalar_select 0, %s4, %s2
  %s7 = sshll.u32 1, 14
  %s8 = sxor.u32 4294967295, %s7
  %s11 = sshll.u32 3, 24
  %s12 = sxor.u32 4294967295, %s11
  %s13 = sand.u32 0, %s12
  %s15 = sor.u32 %s13, 0
  %18 = dma.general %s0, 256, %s1, [#allocation2], [#allocation3], [#allocation4], %s15, 0
  %s19 = smul.u32 1, 16
  %s20 = sshll.u32 %s19, 4
  %21 = dma.done [#allocation2], %s20
  %22 = vsyncmov [#allocation2]
  %s23 = vpop.sfrf %22
  %p24 = scmp.eq.s32.totalorder %s23, 0
  %p25 = pneg %p24
  %27 = shalt.err (%p25)

</llo_original>
